<compile_context>
chip_gen: v5e
topology: v5e:2x2
jax: 0.10.0
libtpu: 0.0.40
codegen_flags: <defaults>
</compile_context>

<pallas_src>
import functools

import jax
import jax.numpy as jnp
from jax import lax
from jax.experimental import pallas as pl
from jax.experimental.pallas import tpu as pltpu

LANES = 128
MAX_TILE_ROWS = 4096   # 2 MiB f32 per input block per step (sweepable 2048-4096)
SUB_ROWS = 512         # bounds live f32 intermediates to (512, 128) arrays


def _round_up(x, m):
    return ((x + m - 1) // m) * m


def _num_tensorcores():
    """Conservative TensorCore count query; defaults to 1 (single-TC safe)."""
    try:
        info = pltpu.get_tpu_info()
    except Exception:
        return 1
    for name in ("num_cores", "core_count", "num_tensorcores",
                 "tensorcore_count", "num_tensor_cores"):
        v = getattr(info, name, None)
        if isinstance(v, int) and v >= 1:
            return v
    return 1


def _chunk_partials(pred_ref, gt_ref, off, size, limit):
    """Reduce `size` rows starting at `off` to an (8, LANES) partial pair."""
    # Native dtype in VMEM; compute in f32 (v5e VPU/EUP have no bf16 path).
    p = pred_ref[pl.ds(off, size), :].astype(jnp.float32)
    g = gt_ref[pl.ds(off, size), :].astype(jnp.float32)

    # NOTE: exact g == 1.0 match is faithful to the PyTorch reference; gt must
    # carry bit-exact 1.0 peaks in whatever dtype it arrives in.
    is_pos = g == 1.0
    is_neg = g < 1.0
    if limit is not None:
        # Only the final partial tile / clamped duplicate tiles take this path.
        row = lax.broadcasted_iota(jnp.int32, (size, LANES), 0)
        valid = row < (limit - off)
        is_pos = jnp.logical_and(is_pos, valid)
        is_neg = jnp.logical_and(is_neg, valid)

    one_m_p = 1.0 - p
    one_m_g = 1.0 - g
    sq = one_m_g * one_m_g
    neg_w = sq * sq                                   # (1 - gt)^4, two muls

    # Single log per element: positives and negatives are mutually exclusive,
    # so select the log argument and the polynomial weight, then one jnp.log.
    x = jnp.where(is_pos, p, one_m_p)
    lg = jnp.log(x)
    w = jnp.where(is_pos, one_m_p * one_m_p, (p * p) * neg_w)
    contrib = jnp.logical_or(is_pos, is_neg)
    # Selects (not mask-multiplies) so -inf/NaN/garbage in dropped lanes never
    # propagates into the sum.
    loss_elem = jnp.where(contrib, lg * w, 0.0)
    pos_elem = jnp.where(is_pos, 1.0, 0.0)

    # (size, 128) -> (8, 128): layout-preserving reshape + pure VPU adds.
    loss_part = jnp.sum(loss_elem.reshape(size // 8, 8, LANES), axis=0)
    pos_part = jnp.sum(pos_elem.reshape(size // 8, 8, LANES), axis=0)
    return loss_part, pos_part


def _accumulate(pred_ref, gt_ref, out_ref, *, tile_rows, sub_rows, limit):
    """Sub-chunked reduction of the whole (tile_rows, 128) block."""
    zero = jnp.zeros((8, LANES), jnp.float32)
    nsub = tile_rows // sub_rows
    rem = tile_rows - nsub * sub_rows

    loss_acc, pos_acc = zero, zero
    if nsub > 0:
        def body(c, carry):
            la, pa = carry
            off = pl.multiple_of(c * sub_rows, sub_rows)
            lp, pp = _chunk_partials(pred_ref, gt_ref, off, sub_rows, limit)
            return la + lp, pa + pp

        loss_acc, pos_acc = lax.fori_loop(0, nsub, body, (loss_acc, pos_acc),
                                          unroll=True)
    if rem:
        lp, pp = _chunk_partials(pred_ref, gt_ref, nsub * sub_rows, rem, limit)
        loss_acc = loss_acc + lp
        pos_acc = pos_acc + pp

    out_ref[0, 0] += loss_acc
    out_ref[0, 1] += pos_acc


def _focal_kernel(pred_ref, gt_ref, out_ref, *, rows, tile_rows, sub_rows,
                  num_tiles, steps, num_cores, needs_mask):
    if num_cores > 1:
        core = pl.program_id(0)   # TensorCore shard axis
        step = pl.program_id(1)   # reduction axis
        flat_step = core * steps + step
    else:
        step = pl.program_id(0)
        flat_step = step

    @pl.when(step == 0)
    def _():
        out_ref[...] = jnp.zeros_like(out_ref)

    acc = functools.partial(_accumulate, pred_ref, gt_ref, out_ref,
                            tile_rows=tile_rows, sub_rows=sub_rows)

    if not needs_mask:
        # Hot path for the common case: no iota / compares / logical_ands.
        acc(limit=None)
    else:
        num_full = rows // tile_rows  # tiles that need no masking

        @pl.when(flat_step < num_full)
        def _():
            acc(limit=None)

        @pl.when(flat_step >= num_full)
        def _():
            # Final partial tile, or a duplicate tile from the clamped
            # index_map (limit == 0 => contributes exactly nothing).
            tile_idx = jnp.minimum(flat_step, num_tiles - 1)
            limit = jnp.where(flat_step < num_tiles,
                              rows - tile_idx * tile_rows, 0)
            acc(limit=limit)


def focal_loss_pallas(pred, gt):
    """FocalLoss.forward(pred, gt) -> scalar loss (float32)."""
    total = pred.size
    pf = pred.reshape(-1)   # free bitcast, native dtype (bf16 inputs OK)
    gf = gt.reshape(-1)

    rem = total % LANES
    if rem:
        # Rare path (total not a multiple of 128): pad <=127 elements with
        # values whose contribution is exactly zero: gt=2 fails both g==1 and
        # g<1, pred=0.5 keeps the log finite.
        pad = LANES - rem
        pf = jnp.concatenate([pf, jnp.full((pad,), 0.5, pf.dtype)])
        gf = jnp.concatenate([gf, jnp.full((pad,), 2.0, gf.dtype)])

    rows = pf.size // LANES
    pf = pf.reshape(rows, LANES)
    gf = gf.reshape(rows, LANES)

    tile_rows = min(MAX_TILE_ROWS, _round_up(rows, 8))
    sub_rows = min(SUB_ROWS, tile_rows)
    num_tiles = pl.cdiv(rows, tile_rows)

    # Only split across TensorCores when the hardware actually has >= 2.
    detected = _num_tensorcores()
    num_cores = 2 if (detected >= 2 and num_tiles >= 2) else 1

    if num_cores > 1:
        steps = pl.cdiv(num_tiles, num_cores)
        grid = (num_cores, steps)

        def in_map(c, s):
            # Clamp to a valid block; duplicate tiles are zeroed in-kernel.
            return (jnp.minimum(c * steps + s, num_tiles - 1), 0)

        out_map = lambda c, s: (c, 0, 0, 0)
        dim_sem = (pltpu.CORE_PARALLEL, pltpu.ARBITRARY)
    else:
        steps = num_tiles
        grid = (num_tiles,)
        in_map = lambda s: (s, 0)
        out_map = lambda s: (0, 0, 0, 0)
        dim_sem = ("arbitrary",)

    needs_mask = (rows % tile_rows != 0) or (num_cores * steps != num_tiles)

    kernel = functools.partial(
        _focal_kernel, rows=rows, tile_rows=tile_rows, sub_rows=sub_rows,
        num_tiles=num_tiles, steps=steps, num_cores=num_cores,
        needs_mask=needs_mask)

    partials = pl.pallas_call(
        kernel,
        out_shape=jax.ShapeDtypeStruct((num_cores, 2, 8, LANES), jnp.float32),
        grid_spec=pltpu.PrefetchScalarGridSpec(
            num_scalar_prefetch=0,
            grid=grid,
            in_specs=[
                pl.BlockSpec((tile_rows, LANES), in_map),
                pl.BlockSpec((tile_rows, LANES), in_map),
            ],
            out_specs=pl.BlockSpec((1, 2, 8, LANES), out_map),
        ),
        compiler_params=pltpu.CompilerParams(
            dimension_semantics=dim_sem,
            vmem_limit_bytes=32 * 1024 * 1024),
    )(pf, gf)

    loss_sum = jnp.sum(partials[:, 0])
    num_pos = jnp.sum(partials[:, 1])
    # -(pos + neg) / num_pos; when num_pos == 0 the positive part is exactly 0,
    # so dividing by max(num_pos, 1) reproduces the `loss - neg_loss` branch.
    return -loss_sum / jnp.maximum(num_pos, 1.0)


def focal_loss_ref(pred, gt):
    """Pure-JAX reference, mirroring the PyTorch forward."""
    pred = pred.astype(jnp.float32)
    gt = gt.astype(jnp.float32)
    pos_inds = (gt == 1.0).astype(jnp.float32)
    neg_inds = (gt < 1.0).astype(jnp.float32)
    neg_weights = (1.0 - gt) ** 4
    pos_loss = jnp.log(pred) * (1.0 - pred) ** 2 * pos_inds
    neg_loss = jnp.log(1.0 - pred) * pred ** 2 * neg_weights * neg_inds
    num_pos = pos_inds.sum()
    pos_loss = pos_loss.sum()
    neg_loss = neg_loss.sum()
    return jnp.where(
        num_pos == 0,
        -neg_loss,
        -(pos_loss + neg_loss) / jnp.where(num_pos == 0, 1.0, num_pos),
    )


if __name__ == "__main__":
    key = jax.random.PRNGKey(0)
    k_pred, k_gt, k_pos = jax.random.split(key, 3)

    B, C, H, W = 2, 4, 16, 16  # NCHW heatmap-style inputs

    # Predictions strictly inside (0, 1) (as produced by a sigmoid head).
    pred = jax.nn.sigmoid(jax.random.normal(k_pred, (B, C, H, W), jnp.float32))
    pred = jnp.clip(pred, 1e-4, 1.0 - 1e-4)

    # Gaussian-ish ground-truth heatmap in [0, 1), with a few exact 1.0 peaks.
    gt = jax.random.uniform(k_gt, (B, C, H, W), jnp.float32, 0.0, 0.999)
    flat_idx = jax.random.choice(k_pos, B * C * H * W, shape=(6,), replace=False)
    gt = gt.reshape(-1).at[flat_idx].set(1.0).reshape(B, C, H, W)

    loss = focal_loss_pallas(pred, gt)
    loss = jax.block_until_ready(loss)

    ref = focal_loss_ref(pred, gt)
    assert jnp.allclose(loss, ref, rtol=1e-5, atol=1e-5), (loss, ref)

    print("KERNEL_OK")
</pallas_src>

<mosaic_0001>
module attributes {stable_mosaic.version = 11 : i64} {
  func.func @_focal_kernel(%arg0: i32, %arg1: memref<16x128xf32, #tpu.memory_space<vmem>>, %arg2: memref<16x128xf32, #tpu.memory_space<vmem>>, %arg3: memref<1x2x8x128xf32, #tpu.memory_space<vmem>>) attributes {dimension_semantics = [#tpu.dimension_semantics<arbitrary>], iteration_bounds = array<i64: 1>, scalar_prefetch = 0 : i64, scratch_operands = 0 : i64, tpu.core_type = #tpu.core_type<tc>, window_params = [{transform_indices = @transform_0, window_bounds = array<i64: 16, 128>}, {transform_indices = @transform_1, window_bounds = array<i64: 16, 128>}, {pipeline_mode = #tpu.pipeline_mode<synchronous>, transform_indices = @transform_2, window_bounds = array<i64: 1, 2, 8, 128>}]} {
    %c0_i32 = arith.constant 0 : i32
    %0 = arith.cmpi eq, %arg0, %c0_i32 : i32
    %1 = arith.extui %0 : i1 to i32
    %c0_i32_0 = arith.constant 0 : i32
    %2 = arith.cmpi ne, %1, %c0_i32_0 : i32
    scf.if %2 {
      %cst_27 = arith.constant 0.000000e+00 : f32
      %51 = vector.broadcast %cst_27 : f32 to vector<1x2x8x128xf32>
      %c0_28 = arith.constant 0 : index
      %c0_29 = arith.constant 0 : index
      %c0_30 = arith.constant 0 : index
      %c0_31 = arith.constant 0 : index
      %52 = vector.load %arg3[%c0_28, %c0_29, %c0_30, %c0_31] : memref<1x2x8x128xf32, #tpu.memory_space<vmem>>, vector<1x2x8x128xf32>
      tpu.vector_store %arg3[%c0_28, %c0_29, %c0_30, %c0_31], %51 {strides = array<i32>} : memref<1x2x8x128xf32, #tpu.memory_space<vmem>>, vector<1x2x8x128xf32>,
    } else {
    }
    %cst = arith.constant 0.000000e+00 : f32
    %3 = vector.broadcast %cst : f32 to vector<8x128xf32>
    %c0_i32_1 = arith.constant 0 : i32
    %c16_i32 = arith.constant 16 : i32
    %4 = arith.muli %c0_i32_1, %c16_i32 : i32
    %5 = tpu.assume_multiple %4, 16 : i32
    %6 = arith.index_cast %5 : i32 to index
    %c0 = arith.constant 0 : index
    %7 = vector.load %arg1[%6, %c0] : memref<16x128xf32, #tpu.memory_space<vmem>>, vector<16x128xf32>
    %8 = arith.index_cast %5 : i32 to index
    %c0_2 = arith.constant 0 : index
    %9 = vector.load %arg2[%8, %c0_2] : memref<16x128xf32, #tpu.memory_space<vmem>>, vector<16x128xf32>
    %cst_3 = arith.constant 1.000000e+00 : f32
    %10 = vector.broadcast %cst_3 : f32 to vector<16x128xf32>
    %11 = arith.cmpf oeq, %9, %10 : vector<16x128xf32>
    %cst_4 = arith.constant 1.000000e+00 : f32
    %12 = vector.broadcast %cst_4 : f32 to vector<16x128xf32>
    %13 = arith.cmpf olt, %9, %12 : vector<16x128xf32>
    %cst_5 = arith.constant 1.000000e+00 : f32
    %14 = vector.broadcast %cst_5 : f32 to vector<16x128xf32>
    %15 = arith.subf %14, %7 : vector<16x128xf32>
    %cst_6 = arith.constant 1.000000e+00 : f32
    %16 = vector.broadcast %cst_6 : f32 to vector<16x128xf32>
    %17 = arith.subf %16, %9 : vector<16x128xf32>
    %18 = arith.mulf %17, %17 : vector<16x128xf32>
    %19 = arith.mulf %18, %18 : vector<16x128xf32>
    %20 = arith.select %11, %7, %15 : vector<16x128xi1>, vector<16x128xf32>
    %21 = math.log %20 : vector<16x128xf32>
    %22 = arith.mulf %15, %15 : vector<16x128xf32>
    %23 = arith.mulf %7, %7 : vector<16x128xf32>
    %24 = arith.mulf %23, %19 : vector<16x128xf32>
    %25 = arith.select %11, %22, %24 : vector<16x128xi1>, vector<16x128xf32>
    %26 = arith.ori %11, %13 : vector<16x128xi1>
    %27 = arith.mulf %21, %25 : vector<16x128xf32>
    %cst_7 = arith.constant 0.000000e+00 : f32
    %28 = vector.broadcast %cst_7 : f32 to vector<16x128xf32>
    %29 = arith.select %26, %27, %28 : vector<16x128xi1>, vector<16x128xf32>
    %cst_8 = arith.constant 1.000000e+00 : f32
    %cst_9 = arith.constant 0.000000e+00 : f32
    %30 = vector.broadcast %cst_8 : f32 to vector<16x128xf32>
    %31 = vector.broadcast %cst_9 : f32 to vector<16x128xf32>
    %32 = arith.select %11, %30, %31 : vector<16x128xi1>, vector<16x128xf32>
    %33 = vector.shape_cast %29 : vector<16x128xf32> to vector<2x8x128xf32>
    %cst_10 = arith.constant dense<0.000000e+00> : vector<8x128xf32>
    %34 = vector.multi_reduction <add>, %33, %cst_10 [0] : vector<2x8x128xf32> to vector<8x128xf32>
    %35 = vector.shape_cast %32 : vector<16x128xf32> to vector<2x8x128xf32>
    %cst_11 = arith.constant dense<0.000000e+00> : vector<8x128xf32>
    %36 = vector.multi_reduction <add>, %35, %cst_11 [0] : vector<2x8x128xf32> to vector<8x128xf32>
    %37 = arith.addf %3, %34 : vector<8x128xf32>
    %38 = arith.addf %3, %36 : vector<8x128xf32>
    %c1_i32 = arith.constant 1 : i32
    %c0_12 = arith.constant 0 : index
    %c0_13 = arith.constant 0 : index
    %c0_14 = arith.constant 0 : index
    %c0_15 = arith.constant 0 : index
    %39 = vector.load %arg3[%c0_12, %c0_13, %c0_14, %c0_15] : memref<1x2x8x128xf32, #tpu.memory_space<vmem>>, vector<1x1x8x128xf32>
    %40 = vector.shape_cast %39 : vector<1x1x8x128xf32> to vector<8x128xf32>
    %41 = arith.addf %40, %37 : vector<8x128xf32>
    %c0_16 = arith.constant 0 : index
    %c0_17 = arith.constant 0 : index
    %c0_18 = arith.constant 0 : index
    %c0_19 = arith.constant 0 : index
    %42 = vector.load %arg3[%c0_16, %c0_17, %c0_18, %c0_19] : memref<1x2x8x128xf32, #tpu.memory_space<vmem>>, vector<1x1x8x128xf32>
    %43 = vector.shape_cast %42 : vector<1x1x8x128xf32> to vector<8x128xf32>
    %44 = vector.shape_cast %41 : vector<8x128xf32> to vector<1x1x8x128xf32>
    tpu.vector_store %arg3[%c0_16, %c0_17, %c0_18, %c0_19], %44 {strides = array<i32>} : memref<1x2x8x128xf32, #tpu.memory_space<vmem>>, vector<1x1x8x128xf32>,
    %c0_20 = arith.constant 0 : index
    %c1 = arith.constant 1 : index
    %c0_21 = arith.constant 0 : index
    %c0_22 = arith.constant 0 : index
    %45 = vector.load %arg3[%c0_20, %c1, %c0_21, %c0_22] : memref<1x2x8x128xf32, #tpu.memory_space<vmem>>, vector<1x1x8x128xf32>
    %46 = vector.shape_cast %45 : vector<1x1x8x128xf32> to vector<8x128xf32>
    %47 = arith.addf %46, %38 : vector<8x128xf32>
    %c0_23 = arith.constant 0 : index
    %c1_24 = arith.constant 1 : index
    %c0_25 = arith.constant 0 : index
    %c0_26 = arith.constant 0 : index
    %48 = vector.load %arg3[%c0_23, %c1_24, %c0_25, %c0_26] : memref<1x2x8x128xf32, #tpu.memory_space<vmem>>, vector<1x1x8x128xf32>
    %49 = vector.shape_cast %48 : vector<1x1x8x128xf32> to vector<8x128xf32>
    %50 = vector.shape_cast %47 : vector<8x128xf32> to vector<1x1x8x128xf32>
    tpu.vector_store %arg3[%c0_23, %c1_24, %c0_25, %c0_26], %50 {strides = array<i32>} : memref<1x2x8x128xf32, #tpu.memory_space<vmem>>, vector<1x1x8x128xf32>,
    return
  }
  func.func @transform_0(%arg0: i32) -> (i32, i32) {
    %c0_i32 = arith.constant 0 : i32
    %c0_i32_0 = arith.constant 0 : i32
    return %arg0, %c0_i32 : i32, i32
  }
  func.func @transform_1(%arg0: i32) -> (i32, i32) {
    %c0_i32 = arith.constant 0 : i32
    %c0_i32_0 = arith.constant 0 : i32
    return %arg0, %c0_i32 : i32, i32
  }
  func.func @transform_2(%arg0: i32) -> (i32, i32, i32, i32) {
    %c0_i32 = arith.constant 0 : i32
    %c0_i32_0 = arith.constant 0 : i32
    %c0_i32_1 = arith.constant 0 : i32
    %c0_i32_2 = arith.constant 0 : i32
    %c0_i32_3 = arith.constant 0 : i32
    return %c0_i32, %c0_i32_0, %c0_i32_1, %c0_i32_2 : i32, i32, i32, i32
  }
}

</mosaic_0001>

<llo_original>
// kernel: tpu_custom_call.1
$region0: #{tpu_custom_call.1}
  #allocation0 [shape = 'u32[]', space=smem, size = 0x4, offset = 0x4, fixed_abs, tag = 'smem constant byte address 0x4 - core index']
  #allocation1 [shape = 'u32[72,128]{1,0:T(1,128)}', space=vmem, size = 0x9000, scoped, tag = 'internal scratch']
  %s0 = inlined_call_operand.hbm [shape: f32[16,128], index: 0, kind: input, shape index: {}]
  %s1 = inlined_call_operand.hbm [shape: f32[16,128], index: 1, kind: input, shape index: {}]
  %s2 = inlined_call_operand.hbm [shape: f32[1,2,8,128], index: 2, kind: output, shape index: {}]
  %s3 = sld [smem:[#allocation0]]
  $region30: #{tpu_custom_call.1} parent=0
    _
  %s5 = ssub.s32 1, %s3
  %s6 = scalar_select 0, %s5, %s3
  $region1: #{tpu_custom_call.1} parent=0
    #allocation2 [shape = 'u8[8192]{0}', space=vmem, size = 0x2000, scoped, tag = 'input window, operand 0, single buffered']
    #allocation3 [shape = 's32[1]{0}', space=sflag, size = 0x4, scoped, tag = 'scoped memory for tpu_custom_call.1']
    #allocation4 [shape = 's32[1]{0}', space=sflag, size = 0x4, scoped, tag = 'scoped memory for tpu_custom_call.1']
    #allocation5 [shape = 'u8[8192]{0}', space=vmem, size = 0x2000, scoped, tag = 'input window, operand 1, single buffered']
    #allocation6 [shape = 's32[1]{0}', space=sflag, size = 0x4, scoped, tag = 'scoped memory for tpu_custom_call.1']
    #allocation7 [shape = 'u8[8192]{0}', space=vmem, size = 0x2000, scoped, tag = 'output window, operand 0, single buffered']
    %7 = vsyncpa [#allocation3], 0
    %8 = vsyncpa [#allocation6], 0
    %9 = vsyncpa [#allocation4], 0
    // Predicated region
    $region2: #{tpu_custom_call.1} parent=1 // pred_check
      _
    $region3: #{tpu_custom_call.1} parent=1 // pred_check_branch
      %11 = sbr.rel (0) target = $region5
    $region4: #{tpu_custom_call.1} parent=1 // pred_region
      %13 = vsyncadd [#allocation3], 0
      %s14 = sshll.u32 %s0, 4
      %s15 = int_to_ptr.hbm [resolvable:$true] %s14
      %s16 = sshll.u32 [#allocation2], 4
      %s17 = int_to_ptr.vmem [resolvable:$true] %s16
      %22 = dma.hbm_to_vmem [thread:$0]  %s15, 256, %s17, [#allocation3], 128, 128, 8
    $region5: #{tpu_custom_call.1} parent=1 // pred_fallthru
      _
    // Predicated region
    $region6: #{tpu_custom_call.1} parent=1 // pred_check
      _
    $region7: #{tpu_custom_call.1} parent=1 // pred_check_branch
      %24 = sbr.rel (0) target = $region9
    $region8: #{tpu_custom_call.1} parent=1 // pred_region
      %26 = vsyncadd [#allocation6], 0
      %s27 = sshll.u32 %s1, 4
      %s28 = int_to_ptr.hbm [resolvable:$true] %s27
      %s29 = sshll.u32 [#allocation5], 4
      %s30 = int_to_ptr.vmem [resolvable:$true] %s29
      %35 = dma.hbm_to_vmem [thread:$0]  %s28, 256, %s30, [#allocation6], 128, 128, 8
    $region9: #{tpu_custom_call.1} parent=1 // pred_fallthru
      _
    // Predicated region
    $region10: #{tpu_custom_call.1} parent=1 // pred_check
      _
    $region11: #{tpu_custom_call.1} parent=1 // pred_check_branch
      %37 = sbr.rel (0) target = $region13
    $region12: #{tpu_custom_call.1} parent=1 // pred_region
      %39 = dma.done [#allocation3], 256
    $region13: #{tpu_custom_call.1} parent=1 // pred_fallthru
      _
    // Predicated region
    $region14: #{tpu_custom_call.1} parent=1 // pred_check
      _
    $region15: #{tpu_custom_call.1} parent=1 // pred_check_branch
      %41 = sbr.rel (0) target = $region17
    $region16: #{tpu_custom_call.1} parent=1 // pred_region
      %43 = dma.done [#allocation6], 256
    $region17: #{tpu_custom_call.1} parent=1 // pred_fallthru
      _
    %p44 = scmp.eq.s32.totalorder 0, 0
    // Predicated region
    $region18: #{tpu_custom_call.1} parent=1 // pred_check
      %p45 = pneg %p44
    $region19: #{tpu_custom_call.1} parent=1 // pred_check_branch
      %47 = sbr.rel (%p45) target = $region21
    $region20: #{tpu_custom_call.1} parent=1 // pred_region
      %48 = vst [vmem:[#allocation7] sm:$0xff] 0.0
      %49 = vst [vmem:[#allocation7 + $0x8] sm:$0xff] 0.0
    $region21: #{tpu_custom_call.1} parent=1 // pred_fallthru
      _
    %v50 = vld [vmem:[#allocation2] sm:$0xff]
    %v51 = vld [vmem:[#allocation2 + $0x8] sm:$0xff]
    %v52 = vld [vmem:[#allocation5] sm:$0xff]
    %v53 = vld [vmem:[#allocation5 + $0x8] sm:$0xff]
    %vm54 = vcmp.eq.f32.partialorder %v52, 1.0
    %vm55 = vcmp.eq.f32.partialorder %v53, 1.0
    %vm56 = vcmp.lt.f32.partialorder %v52, 1.0
    %vm57 = vcmp.lt.f32.partialorder %v53, 1.0
    %v58 = vsub.f32 1.0, %v50
    %v59 = vsub.f32 1.0, %v51
    %v60 = vsub.f32 1.0, %v52
    %v61 = vsub.f32 1.0, %v53
    %v62 = vmul.f32 %v60, %v60
    %v63 = vmul.f32 %v61, %v61
    %v64 = vmul.f32 %v62, %v62
    %v65 = vmul.f32 %v63, %v63
    %v66 = vsel %vm54, %v50, %v58
    %v67 = vsel %vm55, %v51, %v59
    %v68 = vlog2.pop %v66
    %v69 = vmul.f32 %v68, 0.6931472
    %v70 = vlog2.pop %v67
    %v71 = vmul.f32 %v70, 0.6931472
    %v72 = vmul.f32 %v58, %v58
    %v73 = vmul.f32 %v59, %v59
    %v74 = vmul.f32 %v50, %v50
    %v75 = vmul.f32 %v51, %v51
    %v76 = vmul.f32 %v74, %v64
    %v77 = vmul.f32 %v75, %v65
    %v78 = vsel %vm54, %v72, %v76
    %v79 = vsel %vm55, %v73, %v77
    %vm80 = vmor %vm54, %vm56
    %vm81 = vmor %vm55, %vm57
    %v82 = vmul.f32 %v69, %v78
    %v83 = vmul.f32 %v71, %v79
    %v84 = vsel %vm80, %v82, 0.0
    %v85 = vsel %vm81, %v83, 0.0
    %v86 = vsel %vm54, 1.0, 0.0
    %v87 = vsel %vm55, 1.0, 0.0
    %v88 = vadd.f32 %v84, %v85
    %v89 = vadd.f32 %v86, %v87
    %v90 = vadd.f32 %v88, 0.0
    %v91 = vadd.f32 %v89, 0.0
    %v92 = vld [vmem:[#allocation7] sm:$0xff]
    %v93 = vadd.f32 %v92, %v90
    %94 = vst [vmem:[#allocation7] sm:$0xff] %v93
    %s95 = scalar_lea.vmem [#allocation7], 8
    %v96 = vld [vmem:[%s95] sm:$0xff]
    %v97 = vadd.f32 %v96, %v91
    %98 = vst [vmem:[%s95] sm:$0xff] %v97
    // Predicated region
    $region22: #{tpu_custom_call.1} parent=1 // pred_check
      _
    $region23: #{tpu_custom_call.1} parent=1 // pred_check_branch
      %100 = sbr.rel (0) target = $region25
    $region24: #{tpu_custom_call.1} parent=1 // pred_region
      %102 = vsyncadd [#allocation4], 0
      %s103 = sshll.u32 [#allocation7], 4
      %s104 = int_to_ptr.vmem [resolvable:$true] %s103
      %s105 = sshll.u32 %s2, 4
      %s106 = int_to_ptr.hbm [resolvable:$true] %s105
      %111 = dma.vmem_to_hbm [thread:$0]  %s104, 256, %s106, [#allocation4], 128, 128, 8
    $region25: #{tpu_custom_call.1} parent=1 // pred_fallthru
      _
    // Predicated region
    $region26: #{tpu_custom_call.1} parent=1 // pred_check
      _
    $region27: #{tpu_custom_call.1} parent=1 // pred_check_branch
      %113 = sbr.rel (0) target = $region29
    $region28: #{tpu_custom_call.1} parent=1 // pred_region
      %115 = dma.done [#allocation4], 256
    $region29: #{tpu_custom_call.1} parent=1 // pred_fallthru
      _
    %116 = vsyncpa [#allocation3], 1
    %117 = vsyncpa [#allocation6], 1
    %118 = vsyncpa [#allocation4], 1

</llo_original>
